<compile_context>
chip_gen: v7x
topology: tpu7x:2x2x1
jax: 0.10.0
libtpu: 0.0.40
codegen_flags: <defaults>
</compile_context>

<pallas_src>
import math

import jax
import jax.numpy as jnp
from jax.experimental import pallas as pl
from jax.experimental.pallas import tpu as pltpu

LN_EPS = 1e-5
STD_MAX = 2.0  # Policy(std_max=2); std_min=-5 is a no-op lower bound on exp()
OUT_W = 128    # lane-dense output slab width


def _make_policy_kernel(state_dim, latent_dim, hidden_dim, action_dim, out_w):
    SD, LD, HD, A = state_dim, latent_dim, hidden_dim, action_dim

    # Static row offsets inside the packed parameter slab.
    r_enc_w = 0
    r_w1 = r_enc_w + SD
    r_w2 = r_w1 + LD
    r_wh = r_w2 + HD
    r_enc_b = r_wh + HD
    r_ln_g = r_enc_b + 1
    r_ln_b = r_ln_g + 1
    r_b1 = r_ln_b + 1
    r_b2 = r_b1 + 1
    r_bh = r_b2 + 1
    n_rows = r_bh + 1

    log_2pi = math.log(2.0 * math.pi)
    log_2 = math.log(2.0)
    inv_ld = 1.0 / LD

    def kernel(state_ref, eps_ref, p_ref, out_ref):
        x = state_ref[...]            # observation.state  (B, SD)
        eps = eps_ref[...]            # rsample noise      (B, A)

        # --- unpack parameters (static slices, zero-cost views) ---
        enc_w = p_ref[r_enc_w:r_w1, :LD]
        w1 = p_ref[r_w1:r_w2, :HD]
        w2 = p_ref[r_w2:r_wh, :HD]
        w_h = p_ref[r_wh:r_enc_b, :2 * A]        # [wm | ws] fused head weight
        enc_b = p_ref[r_enc_b:r_enc_b + 1, :LD]
        ln_g = p_ref[r_ln_g:r_ln_g + 1, :LD]
        ln_b = p_ref[r_ln_b:r_ln_b + 1, :LD]
        b1 = p_ref[r_b1:r_b1 + 1, :HD]
        b2 = p_ref[r_b2:r_b2 + 1, :HD]
        b_h = p_ref[r_bh:r_bh + 1, :2 * A]       # [bm | bs]

        # --- SACObservationEncoder.state_encoder: Linear -> LayerNorm -> Tanh ---
        h = jnp.dot(x, enc_w, preferred_element_type=jnp.float32) + enc_b
        # single-pass LN stats: the two cross-lane reductions are independent.
        s1 = jnp.sum(h, axis=-1, keepdims=True)
        s2 = jnp.sum(h * h, axis=-1, keepdims=True)
        mu = s1 * inv_ld
        var = s2 * inv_ld - mu * mu
        h = (h - mu) * jax.lax.rsqrt(var + LN_EPS) * ln_g + ln_b
        h = jnp.tanh(h)

        # --- network (MLP): Linear -> ReLU -> Linear -> ReLU ---
        h1 = jnp.maximum(jnp.dot(h, w1, preferred_element_type=jnp.float32) + b1, 0.0)
        h2 = jnp.maximum(jnp.dot(h1, w2, preferred_element_type=jnp.float32) + b2, 0.0)

        # --- fused heads: one matmul produces [means | log_std] ---
        heads = jnp.dot(h2, w_h, preferred_element_type=jnp.float32) + b_h
        means = heads[:, :A]
        log_std = heads[:, A:2 * A]
        # torch.clamp(exp(log_std), -5, 2): lower bound is a no-op on exp output.
        std = jnp.minimum(jnp.exp(log_std), STD_MAX)

        # --- TanhMultivariateNormalDiag.rsample(): covariance = diag(std) => scale = sqrt(std) ---
        scale = jnp.sqrt(std)
        x_pre = means + scale * eps
        actions = jnp.tanh(x_pre)

        # --- log_prob(actions) ---
        # base MVN (cov = diag(std)) at x_pre; mahalanobis == sum(eps^2) exactly.
        mahal = jnp.sum(eps * eps, axis=-1, keepdims=True)
        logdet = jnp.sum(jnp.log(std), axis=-1, keepdims=True)
        base_lp = -0.5 * (A * log_2pi + logdet + mahal)

        # TanhTransform.log_abs_det_jacobian = 2*(log 2 - x - softplus(-2x)), summed over action dim
        z = -2.0 * x_pre
        softplus_z = jnp.maximum(z, 0.0) + jnp.log1p(jnp.exp(-jnp.abs(z)))  # stable softplus
        log_det_tanh = jnp.sum(2.0 * (log_2 - x_pre - softplus_z), axis=-1, keepdims=True)
        logp = base_lp - log_det_tanh  # (B, 1)

        # --- single lane-dense output slab: [means | actions | logp | zero pad] ---
        # (means already sits at lanes 0..A-1 of `heads`, so it needs no lane shift.)
        b = means.shape[0]
        pad = jnp.zeros((b, out_w - (2 * A + 1)), jnp.float32)
        out_ref[...] = jnp.concatenate([means, actions, logp, pad], axis=-1)

    return kernel, n_rows


def pack_params(params):
    """Pack all weights / biases / LN params into a single 2D slab.

    Call this ONCE (when weights change), not per forward call.
    """
    LD = params["enc_w"].shape[1]
    HD = params["w1"].shape[1]
    A = params["wm"].shape[1]
    width = max(LD, HD, 2 * A)

    def padc(m):
        return jnp.pad(m, ((0, 0), (0, width - m.shape[1])))

    w_heads = jnp.concatenate([params["wm"], params["ws"]], axis=1)   # (HD, 2A)
    b_heads = jnp.concatenate([params["bm"], params["bs"]], axis=1)   # (1, 2A)

    slab = jnp.concatenate(
        [
            padc(params["enc_w"]),
            padc(params["w1"]),
            padc(params["w2"]),
            padc(w_heads),
            padc(params["enc_b"]),
            padc(params["ln_g"]),
            padc(params["ln_b"]),
            padc(params["b1"]),
            padc(params["b2"]),
            padc(b_heads),
        ],
        axis=0,
    )
    return slab


def policy_forward(state, eps, p_slab, dims, *, batch_tile=2048):
    """Run the SAC Policy forward pass.

    state: (B, SD) observation.state, eps: (B, A) rsample noise,
    p_slab: pre-packed parameter slab from pack_params() (hoisted out of the loop),
    dims: (state_dim, latent_dim, hidden_dim, action_dim).
    Returns (actions (B,A), log_probs (B,), means (B,A)).
    """
    SD, LD, HD, A = dims
    B = state.shape[0]

    kernel, n_rows = _make_policy_kernel(SD, LD, HD, A, OUT_W)
    assert p_slab.shape[0] == n_rows

    if B <= batch_tile:
        # Single gridless invocation: everything resident in VMEM, no pipeline
        # bookkeeping. This is the latency-optimal path for rollout-sized batches.
        out = pl.pallas_call(
            kernel,
            out_shape=jax.ShapeDtypeStruct((B, OUT_W), jnp.float32),
            in_specs=[
                pl.BlockSpec(memory_space=pltpu.MemorySpace.VMEM),  # state
                pl.BlockSpec(memory_space=pltpu.MemorySpace.VMEM),  # eps
                pl.BlockSpec(memory_space=pltpu.MemorySpace.VMEM),  # param slab
            ],
            out_specs=pl.BlockSpec(memory_space=pltpu.MemorySpace.VMEM),
        )(state, eps, p_slab)
    else:
        # Large (training-sized) batches: tile the batch axis. Keeps per-step VMEM
        # bounded (v7x: 32 MiB default scoped / 64 MiB physical) and lets the
        # "parallel" axis shard across v7x's two TensorCores.
        tb = batch_tile
        out = pl.pallas_call(
            kernel,
            out_shape=jax.ShapeDtypeStruct((B, OUT_W), jnp.float32),
            grid=(pl.cdiv(B, tb),),
            in_specs=[
                pl.BlockSpec((tb, SD), lambda i: (i, 0)),
                pl.BlockSpec((tb, A), lambda i: (i, 0)),
                pl.BlockSpec(memory_space=pltpu.MemorySpace.VMEM),  # whole slab, resident
            ],
            out_specs=pl.BlockSpec((tb, OUT_W), lambda i: (i, 0)),
            compiler_params=pltpu.CompilerParams(dimension_semantics=("parallel",)),
        )(state, eps, p_slab)

    means = out[:, :A]
    actions = out[:, A:2 * A]
    log_probs = out[:, 2 * A]
    return actions, log_probs, means


def init_params(key, state_dim, latent_dim, hidden_dim, action_dim):
    """Deterministic synthetic init (PyTorch default-uniform style).
    # TODO(synk): orthogonal_init of mean/std heads not bit-reproduced; any deterministic init suffices here.
    """
    def linear(k, fan_in, fan_out):
        kw, kb = jax.random.split(k)
        bound = 1.0 / math.sqrt(fan_in)
        w = jax.random.uniform(kw, (fan_in, fan_out), jnp.float32, -bound, bound)
        b = jax.random.uniform(kb, (1, fan_out), jnp.float32, -bound, bound)
        return w, b

    ks = jax.random.split(key, 5)
    enc_w, enc_b = linear(ks[0], state_dim, latent_dim)
    w1, b1 = linear(ks[1], latent_dim, hidden_dim)
    w2, b2 = linear(ks[2], hidden_dim, hidden_dim)
    wm, bm = linear(ks[3], hidden_dim, action_dim)
    ws, bs = linear(ks[4], hidden_dim, action_dim)
    return dict(
        enc_w=enc_w, enc_b=enc_b,
        ln_g=jnp.ones((1, latent_dim), jnp.float32),
        ln_b=jnp.zeros((1, latent_dim), jnp.float32),
        w1=w1, b1=b1, w2=w2, b2=b2,
        wm=wm, bm=bm, ws=ws, bs=bs,
    )


if __name__ == "__main__":
    B, STATE_DIM, LATENT_DIM, HIDDEN_DIM, ACTION_DIM = 2, 16, 32, 32, 4

    key = jax.random.PRNGKey(0)
    k_params, k_state, k_eps = jax.random.split(key, 3)

    params = init_params(k_params, STATE_DIM, LATENT_DIM, HIDDEN_DIM, ACTION_DIM)
    # Hoisted: pack the parameter slab ONCE; reuse across every policy call.
    p_slab = jax.block_until_ready(pack_params(params))
    dims = (STATE_DIM, LATENT_DIM, HIDDEN_DIM, ACTION_DIM)

    state = jax.random.normal(k_state, (B, STATE_DIM), jnp.float32)  # observation.state
    eps = jax.random.normal(k_eps, (B, ACTION_DIM), jnp.float32)     # rsample noise

    actions, log_probs, means = policy_forward(state, eps, p_slab, dims)
    jax.block_until_ready((actions, log_probs, means))

    assert actions.shape == (B, ACTION_DIM)
    assert log_probs.shape == (B,)
    assert means.shape == (B, ACTION_DIM)
    assert bool(jnp.all(jnp.isfinite(actions)))
    assert bool(jnp.all(jnp.isfinite(log_probs)))
    assert bool(jnp.all(jnp.isfinite(means)))
    assert bool(jnp.all(jnp.abs(actions) <= 1.0))  # tanh-squashed

    print("KERNEL_OK")
</pallas_src>

<mosaic_0001>
module attributes {stable_mosaic.version = 11 : i64} {
  func.func @kernel(%arg0: memref<2x16xf32, #tpu.memory_space<vmem>>, %arg1: memref<2x4xf32, #tpu.memory_space<vmem>>, %arg2: memref<118x32xf32, #tpu.memory_space<vmem>>, %arg3: memref<2x128xf32, #tpu.memory_space<vmem>>) attributes {dimension_semantics = [], scalar_prefetch = 0 : i64, scratch_operands = 0 : i64, tpu.core_type = #tpu.core_type<tc>} {
    %c0 = arith.constant 0 : index
    %c0_0 = arith.constant 0 : index
    %0 = vector.load %arg0[%c0, %c0_0] : memref<2x16xf32, #tpu.memory_space<vmem>>, vector<2x16xf32>
    %c0_1 = arith.constant 0 : index
    %c0_2 = arith.constant 0 : index
    %1 = vector.load %arg1[%c0_1, %c0_2] : memref<2x4xf32, #tpu.memory_space<vmem>>, vector<2x4xf32>
    %c0_3 = arith.constant 0 : index
    %c0_4 = arith.constant 0 : index
    %2 = vector.load %arg2[%c0_3, %c0_4] : memref<118x32xf32, #tpu.memory_space<vmem>>, vector<16x32xf32>
    %c16 = arith.constant 16 : index
    %c0_5 = arith.constant 0 : index
    %3 = vector.load %arg2[%c16, %c0_5] : memref<118x32xf32, #tpu.memory_space<vmem>>, vector<32x32xf32>
    %c48 = arith.constant 48 : index
    %c0_6 = arith.constant 0 : index
    %4 = vector.load %arg2[%c48, %c0_6] : memref<118x32xf32, #tpu.memory_space<vmem>>, vector<32x32xf32>
    %c80 = arith.constant 80 : index
    %c0_7 = arith.constant 0 : index
    %5 = vector.load %arg2[%c80, %c0_7] : memref<118x32xf32, #tpu.memory_space<vmem>>, vector<32x8xf32>
    %c112 = arith.constant 112 : index
    %c0_8 = arith.constant 0 : index
    %6 = vector.load %arg2[%c112, %c0_8] : memref<118x32xf32, #tpu.memory_space<vmem>>, vector<1x32xf32>
    %c113 = arith.constant 113 : index
    %c0_9 = arith.constant 0 : index
    %7 = vector.load %arg2[%c113, %c0_9] : memref<118x32xf32, #tpu.memory_space<vmem>>, vector<1x32xf32>
    %c114 = arith.constant 114 : index
    %c0_10 = arith.constant 0 : index
    %8 = vector.load %arg2[%c114, %c0_10] : memref<118x32xf32, #tpu.memory_space<vmem>>, vector<1x32xf32>
    %c115 = arith.constant 115 : index
    %c0_11 = arith.constant 0 : index
    %9 = vector.load %arg2[%c115, %c0_11] : memref<118x32xf32, #tpu.memory_space<vmem>>, vector<1x32xf32>
    %c116 = arith.constant 116 : index
    %c0_12 = arith.constant 0 : index
    %10 = vector.load %arg2[%c116, %c0_12] : memref<118x32xf32, #tpu.memory_space<vmem>>, vector<1x32xf32>
    %c117 = arith.constant 117 : index
    %c0_13 = arith.constant 0 : index
    %11 = vector.load %arg2[%c117, %c0_13] : memref<118x32xf32, #tpu.memory_space<vmem>>, vector<1x8xf32>
    %cst = arith.constant dense<0.000000e+00> : vector<2x32xf32>
    %12 = tpu.matmul %0, %2, %cst {dimension_numbers = #tpu.dot_dimension_numbers<[1], [0], [0], [1], [0, 0, 1, 1], [], []>} : vector<2x16xf32>, vector<16x32xf32>, vector<2x32xf32> -> vector<2x32xf32>
    %13 = vector.broadcast %6 : vector<1x32xf32> to vector<2x32xf32>
    %14 = arith.addf %12, %13 : vector<2x32xf32>
    %cst_14 = arith.constant dense<0.000000e+00> : vector<2xf32>
    %15 = vector.multi_reduction <add>, %14, %cst_14 [1] : vector<2x32xf32> to vector<2xf32>
    %16 = vector.shape_cast %15 : vector<2xf32> to vector<2x1xf32>
    %17 = arith.mulf %14, %14 : vector<2x32xf32>
    %cst_15 = arith.constant dense<0.000000e+00> : vector<2xf32>
    %18 = vector.multi_reduction <add>, %17, %cst_15 [1] : vector<2x32xf32> to vector<2xf32>
    %19 = vector.shape_cast %18 : vector<2xf32> to vector<2x1xf32>
    %cst_16 = arith.constant 3.125000e-02 : f32
    %20 = vector.broadcast %cst_16 : f32 to vector<2x1xf32>
    %21 = arith.mulf %16, %20 : vector<2x1xf32>
    %cst_17 = arith.constant 3.125000e-02 : f32
    %22 = vector.broadcast %cst_17 : f32 to vector<2x1xf32>
    %23 = arith.mulf %19, %22 : vector<2x1xf32>
    %24 = arith.mulf %21, %21 : vector<2x1xf32>
    %25 = arith.subf %23, %24 : vector<2x1xf32>
    %26 = vector.broadcast %21 : vector<2x1xf32> to vector<2x32xf32>
    %27 = arith.subf %14, %26 : vector<2x32xf32>
    %cst_18 = arith.constant 9.99999974E-6 : f32
    %28 = vector.broadcast %cst_18 : f32 to vector<2x1xf32>
    %29 = arith.addf %25, %28 : vector<2x1xf32>
    %30 = math.rsqrt %29 : vector<2x1xf32>
    %31 = vector.broadcast %30 : vector<2x1xf32> to vector<2x32xf32>
    %32 = arith.mulf %27, %31 : vector<2x32xf32>
    %33 = vector.broadcast %7 : vector<1x32xf32> to vector<2x32xf32>
    %34 = arith.mulf %32, %33 : vector<2x32xf32>
    %35 = vector.broadcast %8 : vector<1x32xf32> to vector<2x32xf32>
    %36 = arith.addf %34, %35 : vector<2x32xf32>
    %37 = math.tanh %36 : vector<2x32xf32>
    %cst_19 = arith.constant dense<0.000000e+00> : vector<2x32xf32>
    %38 = tpu.matmul %37, %3, %cst_19 {dimension_numbers = #tpu.dot_dimension_numbers<[1], [0], [0], [1], [0, 0, 1, 1], [], []>} : vector<2x32xf32>, vector<32x32xf32>, vector<2x32xf32> -> vector<2x32xf32>
    %39 = vector.broadcast %9 : vector<1x32xf32> to vector<2x32xf32>
    %40 = arith.addf %38, %39 : vector<2x32xf32>
    %cst_20 = arith.constant 0.000000e+00 : f32
    %41 = vector.broadcast %cst_20 : f32 to vector<2x32xf32>
    %42 = arith.maximumf %40, %41 : vector<2x32xf32>
    %cst_21 = arith.constant dense<0.000000e+00> : vector<2x32xf32>
    %43 = tpu.matmul %42, %4, %cst_21 {dimension_numbers = #tpu.dot_dimension_numbers<[1], [0], [0], [1], [0, 0, 1, 1], [], []>} : vector<2x32xf32>, vector<32x32xf32>, vector<2x32xf32> -> vector<2x32xf32>
    %44 = vector.broadcast %10 : vector<1x32xf32> to vector<2x32xf32>
    %45 = arith.addf %43, %44 : vector<2x32xf32>
    %cst_22 = arith.constant 0.000000e+00 : f32
    %46 = vector.broadcast %cst_22 : f32 to vector<2x32xf32>
    %47 = arith.maximumf %45, %46 : vector<2x32xf32>
    %cst_23 = arith.constant dense<0.000000e+00> : vector<2x8xf32>
    %48 = tpu.matmul %47, %5, %cst_23 {dimension_numbers = #tpu.dot_dimension_numbers<[1], [0], [0], [1], [0, 0, 1, 1], [], []>} : vector<2x32xf32>, vector<32x8xf32>, vector<2x8xf32> -> vector<2x8xf32>
    %49 = vector.broadcast %11 : vector<1x8xf32> to vector<2x8xf32>
    %50 = arith.addf %48, %49 : vector<2x8xf32>
    %51 = vector.extract_strided_slice %50 {offsets = [0, 0], sizes = [2, 4], strides = [1, 1]} : vector<2x8xf32> to vector<2x4xf32>
    %52 = vector.extract_strided_slice %50 {offsets = [0, 4], sizes = [2, 4], strides = [1, 1]} : vector<2x8xf32> to vector<2x4xf32>
    %53 = math.exp %52 : vector<2x4xf32>
    %cst_24 = arith.constant 2.000000e+00 : f32
    %54 = vector.broadcast %cst_24 : f32 to vector<2x4xf32>
    %55 = arith.minimumf %53, %54 : vector<2x4xf32>
    %56 = math.sqrt %55 : vector<2x4xf32>
    %57 = arith.mulf %56, %1 : vector<2x4xf32>
    %58 = arith.addf %51, %57 : vector<2x4xf32>
    %59 = math.tanh %58 : vector<2x4xf32>
    %60 = arith.mulf %1, %1 : vector<2x4xf32>
    %cst_25 = arith.constant dense<0.000000e+00> : vector<2xf32>
    %61 = vector.multi_reduction <add>, %60, %cst_25 [1] : vector<2x4xf32> to vector<2xf32>
    %62 = vector.shape_cast %61 : vector<2xf32> to vector<2x1xf32>
    %63 = math.log %55 : vector<2x4xf32>
    %cst_26 = arith.constant dense<0.000000e+00> : vector<2xf32>
    %64 = vector.multi_reduction <add>, %63, %cst_26 [1] : vector<2x4xf32> to vector<2xf32>
    %65 = vector.shape_cast %64 : vector<2xf32> to vector<2x1xf32>
    %cst_27 = arith.constant 7.35150814 : f32
    %66 = vector.broadcast %cst_27 : f32 to vector<2x1xf32>
    %67 = arith.addf %66, %65 : vector<2x1xf32>
    %68 = arith.addf %67, %62 : vector<2x1xf32>
    %cst_28 = arith.constant -5.000000e-01 : f32
    %69 = vector.broadcast %cst_28 : f32 to vector<2x1xf32>
    %70 = arith.mulf %69, %68 : vector<2x1xf32>
    %cst_29 = arith.constant -2.000000e+00 : f32
    %71 = vector.broadcast %cst_29 : f32 to vector<2x4xf32>
    %72 = arith.mulf %71, %58 : vector<2x4xf32>
    %cst_30 = arith.constant 0.000000e+00 : f32
    %73 = vector.broadcast %cst_30 : f32 to vector<2x4xf32>
    %74 = arith.maximumf %72, %73 : vector<2x4xf32>
    %75 = math.absf %72 : vector<2x4xf32>
    %cst_31 = arith.constant 0.000000e+00 : f32
    %76 = vector.broadcast %cst_31 : f32 to vector<2x4xf32>
    %77 = arith.subf %76, %75 : vector<2x4xf32>
    %78 = math.exp %77 : vector<2x4xf32>
    %79 = math.log1p %78 : vector<2x4xf32>
    %80 = arith.addf %74, %79 : vector<2x4xf32>
    %cst_32 = arith.constant 0.693147182 : f32
    %81 = vector.broadcast %cst_32 : f32 to vector<2x4xf32>
    %82 = arith.subf %81, %58 : vector<2x4xf32>
    %83 = arith.subf %82, %80 : vector<2x4xf32>
    %cst_33 = arith.constant 2.000000e+00 : f32
    %84 = vector.broadcast %cst_33 : f32 to vector<2x4xf32>
    %85 = arith.mulf %84, %83 : vector<2x4xf32>
    %cst_34 = arith.constant dense<0.000000e+00> : vector<2xf32>
    %86 = vector.multi_reduction <add>, %85, %cst_34 [1] : vector<2x4xf32> to vector<2xf32>
    %87 = vector.shape_cast %86 : vector<2xf32> to vector<2x1xf32>
    %88 = arith.subf %70, %87 : vector<2x1xf32>
    %cst_35 = arith.constant 0.000000e+00 : f32
    %89 = vector.broadcast %cst_35 : f32 to vector<2x119xf32>
    %90 = tpu.concatenate %51, %59, %88, %89 in 1 : vector<2x4xf32>, vector<2x4xf32>, vector<2x1xf32>, vector<2x119xf32> -> vector<2x128xf32>
    %c0_36 = arith.constant 0 : index
    %c0_37 = arith.constant 0 : index
    %91 = vector.load %arg3[%c0_36, %c0_37] : memref<2x128xf32, #tpu.memory_space<vmem>>, vector<2x128xf32>
    tpu.vector_store %arg3[%c0_36, %c0_37], %90 {strides = array<i32>} : memref<2x128xf32, #tpu.memory_space<vmem>>, vector<2x128xf32>,
    return
  }
}

</mosaic_0001>

<llo_original>
// kernel: tpu_custom_call.1
$region0: #{tpu_custom_call.1}
  #allocation0 [shape = 'u32[]', space=smem, size = 0x4, offset = 0x4, fixed_abs, tag = 'smem constant byte address 0x4 - core index']
  #allocation1 [shape = 'u32[144,128]{1,0:T(1,128)}', space=vmem, size = 0x12000, scoped, tag = 'internal scratch']
  %s0 = inlined_call_operand.vmem [shape: f32[2,16], index: 0, kind: input, shape index: {}]
  %s1 = inlined_call_operand.vmem [shape: f32[2,4], index: 1, kind: input, shape index: {}]
  %s2 = inlined_call_operand.vmem [shape: f32[118,32], index: 2, kind: input, shape index: {}]
  %s3 = inlined_call_operand.hbm [shape: f32[2,128], index: 3, kind: output, shape index: {}]
  %s4 = sld [smem:[#allocation0]]
  $region22: #{tpu_custom_call.1} parent=0
    _
  %s6 = ssub.s32 1, %s4
  %s7 = scalar_select 0, %s6, %s4
  $region1: #{tpu_custom_call.1} parent=0
    #allocation2 [shape = 'u8[1024]{0}', space=vmem, size = 0x400, scoped, tag = 'output window, operand 0, single buffered']
    #allocation3 [shape = 's32[1]{0}', space=sflag, size = 0x4, scoped, tag = 'scoped memory for tpu_custom_call.1']
    %8 = vsyncpa [#allocation3], 0
    // Predicated region
    $region2: #{tpu_custom_call.1} parent=1 // pred_check
      _
    $region3: #{tpu_custom_call.1} parent=1 // pred_check_branch
      %10 = sbr.rel (0) target = $region5
    $region4: #{tpu_custom_call.1} parent=1 // pred_region
      _
    $region5: #{tpu_custom_call.1} parent=1 // pred_fallthru
      _
    // Predicated region
    $region6: #{tpu_custom_call.1} parent=1 // pred_check
      _
    $region7: #{tpu_custom_call.1} parent=1 // pred_check_branch
      %12 = sbr.rel (0) target = $region9
    $region8: #{tpu_custom_call.1} parent=1 // pred_region
      _
    $region9: #{tpu_custom_call.1} parent=1 // pred_fallthru
      _
    // Predicated region
    $region10: #{tpu_custom_call.1} parent=1 // pred_check
      _
    $region11: #{tpu_custom_call.1} parent=1 // pred_check_branch
      %14 = sbr.rel (0) target = $region13
    $region12: #{tpu_custom_call.1} parent=1 // pred_region
      _
    $region13: #{tpu_custom_call.1} parent=1 // pred_fallthru
      _
    %v15 = vld [vmem:[%s0] sm:$0x3]
    %v16 = vld [vmem:[%s1] sm:$0x3]
    %v17 = vld [vmem:[%s2] sm:$0xff]
    %v18 = vld [vmem:[%s2 + $0x8] sm:$0xff]
    %v19 = vld [vmem:[%s2 + $0x10] sm:$0xff]
    %v20 = vld [vmem:[%s2 + $0x18] sm:$0xff]
    %v21 = vld [vmem:[%s2 + $0x20] sm:$0xff]
    %v22 = vld [vmem:[%s2 + $0x28] sm:$0xff]
    %v23 = vld [vmem:[%s2 + $0x30] sm:$0xff]
    %v24 = vld [vmem:[%s2 + $0x38] sm:$0xff]
    %v25 = vld [vmem:[%s2 + $0x40] sm:$0xff]
    %v26 = vld [vmem:[%s2 + $0x48] sm:$0xff]
    %v27 = vld [vmem:[%s2 + $0x50] sm:$0xff]
    %v28 = vld [vmem:[%s2 + $0x58] sm:$0xff]
    %v29 = vld [vmem:[%s2 + $0x60] sm:$0xff]
    %v30 = vld [vmem:[%s2 + $0x68] sm:$0xff]
    %v31 = vld [vmem:[%s2 + $0x70] sm:$0x1]
    %v32 = vld [vmem:[%s2 + $0x71] sm:$0x1]
    %v33 = vld [vmem:[%s2 + $0x72] sm:$0x1]
    %v34 = vld [vmem:[%s2 + $0x73] sm:$0x1]
    %v35 = vld [vmem:[%s2 + $0x74] sm:$0x1]
    %v36 = vld [vmem:[%s2 + $0x75] sm:$0x1]
    %v37 = vlaneseq
    %v38 = vshrl.u32 %v37, 7
    %v39 = vsub.s32 0, %v38
    %v40 = vrot.slane %v31, %v39
    %vm41 = vcmask 130048
    %v43 = vsel %vm41, %v15, 0
    %45 = vmatprep.subr.mxu0 0.0
    %46 = vmatpush1.msra.mxu0 %v17
    %47 = vmatprep.subr.mxu0 0.0
    %48 = vmatpush1.msra.mxu0 %v18
    %49 = vmatprep.subr.mxu0 0.0
    %50 = vmatpush1.msra.mxu0 0.0
    %51 = vmatprep.subr.mxu0 0.0
    %52 = vmatpush1.msra.mxu0 0.0
    %53 = vmatprep.subr.mxu0 0.0
    %54 = vmatpush1.msra.mxu0 0.0
    %55 = vmatprep.subr.mxu0 0.0
    %56 = vmatpush1.msra.mxu0 0.0
    %57 = vmatprep.subr.mxu0 0.0
    %58 = vmatpush1.msra.mxu0 0.0
    %59 = vmatprep.subr.mxu0 0.0
    %60 = vmatpush1.msra.mxu0 0.0
    %61 = vmatprep.subr.mxu0 0.0
    %62 = vmatpush1.msra.mxu0 0.0
    %63 = vmatprep.subr.mxu0 0.0
    %64 = vmatpush1.msra.mxu0 0.0
    %65 = vmatprep.subr.mxu0 0.0
    %66 = vmatpush1.msra.mxu0 0.0
    %67 = vmatprep.subr.mxu0 0.0
    %68 = vmatpush1.msra.mxu0 0.0
    %69 = vmatprep.subr.mxu0 0.0
    %70 = vmatpush1.msra.mxu0 0.0
    %71 = vmatprep.subr.mxu0 0.0
    %72 = vmatpush1.msra.mxu0 0.0
    %73 = vmatprep.subr.mxu0 0.0
    %74 = vmatpush1.msra.mxu0 0.0
    %75 = vmatprep.subr.mxu0 0.0
    %76 = vmatpush1.msra.mxu0 0.0
    %77 = vmatprep.subr.mxu0 0.0
    %78 = vmatpush1.msra.mxu0 0.0
    %79 = vmatprep.subr.mxu0 0.0
    %80 = vmatpush1.msra.mxu0 0.0
    %81 = vmatprep.subr.mxu0 0.0
    %82 = vmatpush1.msra.mxu0 0.0
    %83 = vmatprep.subr.mxu0 0.0
    %84 = vmatpush1.msra.mxu0 0.0
    %85 = vmatprep.subr.mxu0 0.0
    %86 = vmatpush1.msra.mxu0 0.0
    %87 = vmatprep.subr.mxu0 0.0
    %88 = vmatpush1.msra.mxu0 0.0
    %89 = vmatprep.subr.mxu0 0.0
    %90 = vmatpush1.msra.mxu0 0.0
    %91 = vmatprep.subr.mxu0 0.0
    %92 = vmatpush1.msra.mxu0 0.0
    %93 = vmatprep.subr.mxu0 0.0
    %94 = vmatpush1.msra.mxu0 0.0
    %95 = vmatprep.subr.mxu0 0.0
    %96 = vmatpush1.msra.mxu0 0.0
    %97 = vmatprep.subr.mxu0 0.0
    %98 = vmatpush1.msra.mxu0 0.0
    %99 = vmatprep.subr.mxu0 0.0
    %100 = vmatpush1.msra.mxu0 0.0
    %101 = vmatprep.subr.mxu0 0.0
    %102 = vmatpush1.msra.mxu0 0.0
    %103 = vmatprep.subr.mxu0 0.0
    %104 = vmatpush1.msra.mxu0 0.0
    %105 = vmatprep.subr.mxu0 0.0
    %106 = vmatpush1.msra.mxu0 0.0
    %107 = vmatprep.subr.mxu0 0.0
    %108 = vmatpush1.msra.mxu0 0.0
    %109 = vmatprep.mubr.f32.mxu0 0.0
    %110 = vmatmul.mubr.f32.gmra.mrb[0].mxu0 %v43
    %v111 = vpop.f32.mrb[0].mxu0
    %v112 = vadd.f32 %v40, %v111
    %v113 = vpop.f32.mrb[0].mxu0
    %114 = vdwg.mxu0
    %vm115 = vcmask 254976
    %v116 = vsel %vm115, %v112, 0.0
    %117 = vadd.xlane.f32.xlu0 %v116
    %v118 = vpop.xlane.xlu0 %117
    %v119 = vmul.f32 %v112, %v112
    %v120 = vsel %vm115, %v119, 0.0
    %121 = vadd.xlane.f32.xlu0 %v120
    %v122 = vpop.xlane.xlu0 %121
    %v123 = vmul.f32 %v118, 0.03125
    %v124 = vmul.f32 %v122, 0.03125
    %v125 = vmul.f32 %v123, %v123
    %v126 = vsub.f32 %v124, %v125
    %v127 = vsub.f32 %v112, %v123
    %v128 = vadd.f32 %v126, 1e-05
    %v129 = vrsqrt.pop %v128
    %v130 = vmul.f32 %v127, %v129
    %v131 = vlaneseq
    %v132 = vshrl.u32 %v131, 7
    %v133 = vsub.s32 0, %v132
    %v134 = vrot.slane %v32, %v133
    %v135 = vmul.f32 %v130, %v134
    %v136 = vlaneseq
    %v137 = vshrl.u32 %v136, 7
    %v138 = vsub.s32 0, %v137
    %v139 = vrot.slane %v33, %v138
    %v140 = vadd.f32 %v135, %v139
    %v141 = vtanh.pop %v140
    %v142 = vlaneseq
    %v143 = vshrl.u32 %v142, 7
    %v144 = vsub.s32 0, %v143
    %v145 = vrot.slane %v34, %v144
    %vm146 = vcmask 261120
    %v148 = vsel %vm146, %v141, 0
    %150 = vmatprep.subr.mxu0 0.0
    %151 = vmatpush1.msra.mxu0 %v19
    %152 = vmatprep.subr.mxu0 0.0
    %153 = vmatpush1.msra.mxu0 %v20
    %154 = vmatprep.subr.mxu0 0.0
    %155 = vmatpush1.msra.mxu0 %v21
    %156 = vmatprep.subr.mxu0 0.0
    %157 = vmatpush1.msra.mxu0 %v22
    %158 = vmatprep.subr.mxu0 0.0
    %159 = vmatpush1.msra.mxu0 0.0
    %160 = vmatprep.subr.mxu0 0.0
    %161 = vmatpush1.msra.mxu0 0.0
    %162 = vmatprep.subr.mxu0 0.0
    %163 = vmatpush1.msra.mxu0 0.0
    %164 = vmatprep.subr.mxu0 0.0
    %165 = vmatpush1.msra.mxu0 0.0
    %166 = vmatprep.subr.mxu0 0.0
    %167 = vmatpush1.msra.mxu0 0.0
    %168 = vmatprep.subr.mxu0 0.0
    %169 = vmatpush1.msra.mxu0 0.0
    %170 = vmatprep.subr.mxu0 0.0
    %171 = vmatpush1.msra.mxu0 0.0
    %172 = vmatprep.subr.mxu0 0.0
    %173 = vmatpush1.msra.mxu0 0.0
    %174 = vmatprep.subr.mxu0 0.0
    %175 = vmatpush1.msra.mxu0 0.0
    %176 = vmatprep.subr.mxu0 0.0
    %177 = vmatpush1.msra.mxu0 0.0
    %178 = vmatprep.subr.mxu0 0.0
    %179 = vmatpush1.msra.mxu0 0.0
    %180 = vmatprep.subr.mxu0 0.0
    %181 = vmatpush1.msra.mxu0 0.0
    %182 = vmatprep.subr.mxu0 0.0
    %183 = vmatpush1.msra.mxu0 0.0
    %184 = vmatprep.subr.mxu0 0.0
    %185 = vmatpush1.msra.mxu0 0.0
    %186 = vmatprep.subr.mxu0 0.0
    %187 = vmatpush1.msra.mxu0 0.0
    %188 = vmatprep.subr.mxu0 0.0
    %189 = vmatpush1.msra.mxu0 0.0
    %190 = vmatprep.subr.mxu0 0.0
    %191 = vmatpush1.msra.mxu0 0.0
    %192 = vmatprep.subr.mxu0 0.0
    %193 = vmatpush1.msra.mxu0 0.0
    %194 = vmatprep.subr.mxu0 0.0
    %195 = vmatpush1.msra.mxu0 0.0
    %196 = vmatprep.subr.mxu0 0.0
    %197 = vmatpush1.msra.mxu0 0.0
    %198 = vmatprep.subr.mxu0 0.0
    %199 = vmatpush1.msra.mxu0 0.0
    %200 = vmatprep.subr.mxu0 0.0
    %201 = vmatpush1.msra.mxu0 0.0
    %202 = vmatprep.subr.mxu0 0.0
    %203 = vmatpush1.msra.mxu0 0.0
    %204 = vmatprep.subr.mxu0 0.0
    %205 = vmatpush1.msra.mxu0 0.0
    %206 = vmatprep.subr.mxu0 0.0
    %207 = vmatpush1.msra.mxu0 0.0
    %208 = vmatprep.subr.mxu0 0.0
    %209 = vmatpush1.msra.mxu0 0.0
    %210 = vmatprep.subr.mxu0 0.0
    %211 = vmatpush1.msra.mxu0 0.0
    %212 = vmatprep.subr.mxu0 0.0
    %213 = vmatpush1.msra.mxu0 0.0
    %214 = vmatprep.mubr.f32.mxu0 0.0
    %215 = vmatmul.mubr.f32.gmra.mrb[0].mxu0 %v148
    %v216 = vpop.f32.mrb[0].mxu0
    %v217 = vadd.f32 %v145, %v216
    %v218 = vpop.f32.mrb[0].mxu0
    %219 = vdwg.mxu0
    %v220 = vmax.f32 %v217, 0.0
    %v221 = vlaneseq
    %v222 = vshrl.u32 %v221, 7
    %v223 = vsub.s32 0, %v222
    %v224 = vrot.slane %v35, %v223
    %v226 = vsel %vm146, %v220, 0
    %228 = vmatprep.subr.mxu0 0.0
    %229 = vmatpush1.msra.mxu0 %v23
    %230 = vmatprep.subr.mxu0 0.0
    %231 = vmatpush1.msra.mxu0 %v24
    %232 = vmatprep.subr.mxu0 0.0
    %233 = vmatpush1.msra.mxu0 %v25
    %234 = vmatprep.subr.mxu0 0.0
    %235 = vmatpush1.msra.mxu0 %v26
    %236 = vmatprep.subr.mxu0 0.0
    %237 = vmatpush1.msra.mxu0 0.0
    %238 = vmatprep.subr.mxu0 0.0
    %239 = vmatpush1.msra.mxu0 0.0
    %240 = vmatprep.subr.mxu0 0.0
    %241 = vmatpush1.msra.mxu0 0.0
    %242 = vmatprep.subr.mxu0 0.0
    %243 = vmatpush1.msra.mxu0 0.0
    %244 = vmatprep.subr.mxu0 0.0
    %245 = vmatpush1.msra.mxu0 0.0
    %246 = vmatprep.subr.mxu0 0.0
    %247 = vmatpush1.msra.mxu0 0.0
    %248 = vmatprep.subr.mxu0 0.0
    %249 = vmatpush1.msra.mxu0 0.0
    %250 = vmatprep.subr.mxu0 0.0
    %251 = vmatpush1.msra.mxu0 0.0
    %252 = vmatprep.subr.mxu0 0.0
    %253 = vmatpush1.msra.mxu0 0.0
    %254 = vmatprep.subr.mxu0 0.0
    %255 = vmatpush1.msra.mxu0 0.0
    %256 = vmatprep.subr.mxu0 0.0
    %257 = vmatpush1.msra.mxu0 0.0
    %258 = vmatprep.subr.mxu0 0.0
    %259 = vmatpush1.msra.mxu0 0.0
    %260 = vmatprep.subr.mxu0 0.0
    %261 = vmatpush1.msra.mxu0 0.0
    %262 = vmatprep.subr.mxu0 0.0
    %263 = vmatpush1.msra.mxu0 0.0
    %264 = vmatprep.subr.mxu0 0.0
    %265 = vmatpush1.msra.mxu0 0.0
    %266 = vmatprep.subr.mxu0 0.0
    %267 = vmatpush1.msra.mxu0 0.0
    %268 = vmatprep.subr.mxu0 0.0
    %269 = vmatpush1.msra.mxu0 0.0
    %270 = vmatprep.subr.mxu0 0.0
    %271 = vmatpush1.msra.mxu0 0.0
    %272 = vmatprep.subr.mxu0 0.0
    %273 = vmatpush1.msra.mxu0 0.0
    %274 = vmatprep.subr.mxu0 0.0
    %275 = vmatpush1.msra.mxu0 0.0
    %276 = vmatprep.subr.mxu0 0.0
    %277 = vmatpush1.msra.mxu0 0.0
    %278 = vmatprep.subr.mxu0 0.0
    %279 = vmatpush1.msra.mxu0 0.0
    %280 = vmatprep.subr.mxu0 0.0
    %281 = vmatpush1.msra.mxu0 0.0
    %282 = vmatprep.subr.mxu0 0.0
    %283 = vmatpush1.msra.mxu0 0.0
    %284 = vmatprep.subr.mxu0 0.0
    %285 = vmatpush1.msra.mxu0 0.0
    %286 = vmatprep.subr.mxu0 0.0
    %287 = vmatpush1.msra.mxu0 0.0
    %288 = vmatprep.subr.mxu0 0.0
    %289 = vmatpush1.msra.mxu0 0.0
    %290 = vmatprep.subr.mxu0 0.0
    %291 = vmatpush1.msra.mxu0 0.0
    %292 = vmatprep.mubr.f32.mxu0 0.0
    %293 = vmatmul.mubr.f32.gmra.mrb[0].mxu0 %v226
    %v294 = vpop.f32.mrb[0].mxu0
    %v295 = vadd.f32 %v224, %v294
    %v296 = vpop.f32.mrb[0].mxu0
    %297 = vdwg.mxu0
    %v298 = vmax.f32 %v295, 0.0
    %v299 = vlaneseq
    %v300 = vshrl.u32 %v299, 7
    %v301 = vsub.s32 0, %v300
    %v302 = vrot.slane %v36, %v301
    %v304 = vsel %vm146, %v298, 0
    %306 = vmatprep.subr.mxu0 0.0
    %307 = vmatpush1.msra.mxu0 %v27
    %308 = vmatprep.subr.mxu0 0.0
    %309 = vmatpush1.msra.mxu0 %v28
    %310 = vmatprep.subr.mxu0 0.0
    %311 = vmatpush1.msra.mxu0 %v29
    %312 = vmatprep.subr.mxu0 0.0
    %313 = vmatpush1.msra.mxu0 %v30
    %314 = vmatprep.subr.mxu0 0.0
    %315 = vmatpush1.msra.mxu0 0.0
    %316 = vmatprep.subr.mxu0 0.0
    %317 = vmatpush1.msra.mxu0 0.0
    %318 = vmatprep.subr.mxu0 0.0
    %319 = vmatpush1.msra.mxu0 0.0
    %320 = vmatprep.subr.mxu0 0.0
    %321 = vmatpush1.msra.mxu0 0.0
    %322 = vmatprep.subr.mxu0 0.0
    %323 = vmatpush1.msra.mxu0 0.0
    %324 = vmatprep.subr.mxu0 0.0
    %325 = vmatpush1.msra.mxu0 0.0
    %326 = vmatprep.subr.mxu0 0.0
    %327 = vmatpush1.msra.mxu0 0.0
    %328 = vmatprep.subr.mxu0 0.0
    %329 = vmatpush1.msra.mxu0 0.0
    %330 = vmatprep.subr.mxu0 0.0
    %331 = vmatpush1.msra.mxu0 0.0
    %332 = vmatprep.subr.mxu0 0.0
    %333 = vmatpush1.msra.mxu0 0.0
    %334 = vmatprep.subr.mxu0 0.0
    %335 = vmatpush1.msra.mxu0 0.0
    %336 = vmatprep.subr.mxu0 0.0
    %337 = vmatpush1.msra.mxu0 0.0
    %338 = vmatprep.subr.mxu0 0.0
    %339 = vmatpush1.msra.mxu0 0.0
    %340 = vmatprep.subr.mxu0 0.0
    %341 = vmatpush1.msra.mxu0 0.0
    %342 = vmatprep.subr.mxu0 0.0
    %343 = vmatpush1.msra.mxu0 0.0
    %344 = vmatprep.subr.mxu0 0.0
    %345 = vmatpush1.msra.mxu0 0.0
    %346 = vmatprep.subr.mxu0 0.0
    %347 = vmatpush1.msra.mxu0 0.0
    %348 = vmatprep.subr.mxu0 0.0
    %349 = vmatpush1.msra.mxu0 0.0
    %350 = vmatprep.subr.mxu0 0.0
    %351 = vmatpush1.msra.mxu0 0.0
    %352 = vmatprep.subr.mxu0 0.0
    %353 = vmatpush1.msra.mxu0 0.0
    %354 = vmatprep.subr.mxu0 0.0
    %355 = vmatpush1.msra.mxu0 0.0
    %356 = vmatprep.subr.mxu0 0.0
    %357 = vmatpush1.msra.mxu0 0.0
    %358 = vmatprep.subr.mxu0 0.0
    %359 = vmatpush1.msra.mxu0 0.0
    %360 = vmatprep.subr.mxu0 0.0
    %361 = vmatpush1.msra.mxu0 0.0
    %362 = vmatprep.subr.mxu0 0.0
    %363 = vmatpush1.msra.mxu0 0.0
    %364 = vmatprep.subr.mxu0 0.0
    %365 = vmatpush1.msra.mxu0 0.0
    %366 = vmatprep.subr.mxu0 0.0
    %367 = vmatpush1.msra.mxu0 0.0
    %368 = vmatprep.subr.mxu0 0.0
    %369 = vmatpush1.msra.mxu0 0.0
    %370 = vmatprep.mubr.f32.mxu0 0.0
    %371 = vmatmul.mubr.f32.gmra.mrb[0].mxu0 %v304
    %v372 = vpop.f32.mrb[0].mxu0
    %v373 = vadd.f32 %v302, %v372
    %v374 = vpop.f32.mrb[0].mxu0
    %375 = vdwg.mxu0
    %v376 = vmul.f32 %v373, 1.442695
    %v377 = vpow.pop %v376
    %v378 = vmin.f32 %v377, 2.0
    %v379 = vrsqrt.pop %v378
    %v380 = vmul.f32 %v378, %v379
    %vm381 = vcmp.eq.f32.partialorder %v378, inf
    %v382 = vsel %vm381, %v378, %v380
    %vm383 = vcmp.eq.f32.partialorder %v378, 0.0
    %v384 = vand.u32 %v378, 2147483648
    %v385 = vsel %vm383, %v384, %v382
    %387 = vrot.lane.b32.xlu0 %v16, 4
    %v388 = vpop.permute.xlu0 %387
    %v390 = vmul.f32 %v385, %v388
    %392 = vrot.lane.b32.xlu0 %v390, 124
    %v393 = vpop.permute.xlu0 %392
    %v395 = vadd.f32 %v373, %v393
    %v396 = vtanh.pop %v395
    %v397 = vmul.f32 %v16, %v16
    %vm398 = vcmask 25600
    %v399 = vsel %vm398, %v397, 0.0
    %400 = vadd.xlane.f32.xlu0 %v399
    %v401 = vpop.xlane.xlu0 %400
    %v402 = vlog2.pop %v378
    %v403 = vmul.f32 %v402, 0.6931472
    %405 = vrot.lane.b32.xlu0 %v403, 124
    %v406 = vpop.permute.xlu0 %405
    %v408 = vsel %vm398, %v406, 0.0
    %409 = vadd.xlane.f32.xlu0 %v408
    %v410 = vpop.xlane.xlu0 %409
    %v411 = vadd.f32 %v410, 7.351508
    %v412 = vadd.f32 %v411, %v401
    %v413 = vmul.f32 %v412, -0.5
    %v414 = vmul.f32 %v395, -2.0
    %v415 = vmax.f32 %v414, 0.0
    %v416 = vand.u32 2147483647, %v414
    %v417 = vsub.f32 0.0, %v416
    %v418 = vmul.f32 %v417, 1.442695
    %v419 = vpow.pop %v418
    %v420 = vadd.f32 %v419, 1.0
    %v421 = vlog2.pop %v420
    %v422 = vmul.f32 %v421, 0.6931472
    %v423 = vmul.f32 -0.5, %v419
    %v424 = vadd.f32 %v423, 1.0
    %v425 = vmul.f32 %v424, %v419
    %v426 = vand.u32 2147483647, %v419
    %vm427 = vcmp.lt.f32.partialorder %v426, 0.0004427343
    %v428 = vsel %vm427, %v425, %v422
    %v429 = vadd.f32 %v415, %v428
    %v430 = vsub.f32 0.6931472, %v395
    %v431 = vsub.f32 %v430, %v429
    %v432 = vmul.f32 %v431, 2.0
    %v433 = vsel %vm398, %v432, 0.0
    %434 = vadd.xlane.f32.xlu0 %v433
    %v435 = vpop.xlane.xlu0 %434
    %v436 = vsub.f32 %v413, %v435
    %438 = vrot.lane.b32.xlu0 %v396, 4
    %v439 = vpop.permute.xlu0 %438
    %vm441 = vcmask 31744
    %v442 = vsel %vm441, %v373, %v439
    %vm443 = vcmask 64512
    %v444 = vsel %vm443, %v442, %v436
    %vm445 = vcmask 72704
    %v446 = vsel %vm445, %v444, 0.0
    %447 = vst [vmem:[#allocation2] sm:$0x3] %v446
    // Predicated region
    $region14: #{tpu_custom_call.1} parent=1 // pred_check
      _
    $region15: #{tpu_custom_call.1} parent=1 // pred_check_branch
      %449 = sbr.rel (0) target = $region17
    $region16: #{tpu_custom_call.1} parent=1 // pred_region
      %s451 = ssub.s32 32, 32
      %452 = vsyncadd [#allocation3], %s451
      %s454 = sshll.u32 [#allocation2], 4
      %s455 = int_to_ptr.vmem [resolvable:$true] %s454
      %457 = dma.vmem_to_hbm [thread:$0]  %s455, 32, %s3, [#allocation3]
    $region17: #{tpu_custom_call.1} parent=1 // pred_fallthru
      _
    // Predicated region
    $region18: #{tpu_custom_call.1} parent=1 // pred_check
      _
    $region19: #{tpu_custom_call.1} parent=1 // pred_check_branch
      %459 = sbr.rel (0) target = $region21
    $region20: #{tpu_custom_call.1} parent=1 // pred_region
      %460 = dma.done [#allocation3], 32
    $region21: #{tpu_custom_call.1} parent=1 // pred_fallthru
      _
    %461 = vsyncpa [#allocation3], 1

</llo_original>
